<compile_context>
chip_gen: v6e
topology: v6e:2x2x1
jax: 0.10.0
libtpu: 0.0.40
codegen_flags: <defaults>
</compile_context>

<pallas_src>
import functools

import jax
import jax.numpy as jnp
from jax.experimental import pallas as pl
from jax.experimental.pallas import tpu as pltpu

_LANE = 128  # TPU vreg lane width


def _mlp_kernel(xt_ref, w1_ref, b1_ref, w2_ref, b2_ref, out_ref):
    # Transposed layout: batch on lanes, features on sublanes.
    #   hT = relu(W1 @ xT + b1) ; yT = W2 @ hT + b2
    h = jnp.dot(w1_ref[...], xt_ref[...], preferred_element_type=jnp.float32)
    h = jnp.maximum(h + b1_ref[...], 0.0)          # bias add + ReLU in f32 (VPU)
    h = h.astype(w2_ref.dtype)                     # feed MXU in the matmul dtype
    y = jnp.dot(w2_ref[...], h, preferred_element_type=jnp.float32)
    out_ref[...] = (y + b2_ref[...]).astype(out_ref.dtype)
    # TODO(synk): biases could be folded into the matmul (ones-row trick), but at
    # K=16/32 the extra padded sublane costs more than the single VPU add saves.


@functools.partial(jax.jit, static_argnames=("use_bf16_matmul", "block_batch"))
def reg_model_forward(x, w1, b1, w2, b2, *, use_bf16_matmul=True, block_batch=512):
    """Forward pass of RegModel.

    x : (B, num_vars) f32
    w1: (num_hidden, num_vars)  f32   (torch nn.Linear layout)
    b1: (num_hidden,)           f32
    w2: (num_output, num_hidden) f32  (torch nn.Linear layout)
    b2: (num_output,)           f32
    returns (B, num_output) f32
    """
    B, num_vars = x.shape
    num_hidden = w1.shape[0]
    num_output = w2.shape[0]

    mm_dtype = jnp.bfloat16 if use_bf16_matmul else jnp.float32

    # Pad batch up to a lane-aligned width (single tile) or a multiple of the
    # batch tile (grid case).
    bp_lane = ((B + _LANE - 1) // _LANE) * _LANE
    if bp_lane <= block_batch:
        b_pad, num_tiles, tb = bp_lane, 1, bp_lane
    else:
        b_pad = ((B + block_batch - 1) // block_batch) * block_batch
        num_tiles, tb = b_pad // block_batch, block_batch

    # Batch-on-lanes layout + dtype prep.
    xt = jnp.zeros((num_vars, b_pad), mm_dtype).at[:, :B].set(x.T.astype(mm_dtype))
    w1c = w1.astype(mm_dtype)
    w2c = w2.astype(mm_dtype)
    b1c = b1.reshape(num_hidden, 1).astype(jnp.float32)
    b2c = b2.reshape(num_output, 1).astype(jnp.float32)

    out_shape = jax.ShapeDtypeStruct((num_output, b_pad), jnp.float32)

    if num_tiles == 1:
        # Whole problem is one block: no grid, no pipeline scaffolding.
        yt = pl.pallas_call(
            _mlp_kernel,
            out_shape=out_shape,
            in_specs=[pl.BlockSpec(memory_space=pltpu.MemorySpace.VMEM)] * 5,
            out_specs=pl.BlockSpec(memory_space=pltpu.MemorySpace.VMEM),
        )(xt, w1c, b1c, w2c, b2c)
    else:
        # Stream x/out tiles over a parallel batch grid; weights stay resident.
        yt = pl.pallas_call(
            _mlp_kernel,
            out_shape=out_shape,
            grid=(num_tiles,),
            in_specs=[
                pl.BlockSpec((num_vars, tb), lambda i: (0, i)),          # xT tile
                pl.BlockSpec((num_hidden, num_vars), lambda i: (0, 0)),  # W1 (resident)
                pl.BlockSpec((num_hidden, 1), lambda i: (0, 0)),         # b1 (resident)
                pl.BlockSpec((num_output, num_hidden), lambda i: (0, 0)),# W2 (resident)
                pl.BlockSpec((num_output, 1), lambda i: (0, 0)),         # b2 (resident)
            ],
            out_specs=pl.BlockSpec((num_output, tb), lambda i: (0, i)),
            compiler_params=pltpu.CompilerParams(
                dimension_semantics=("parallel",),   # shards across both TCs on v7x
                vmem_limit_bytes=32 * 1024 * 1024,   # safe headroom even on v7x
            ),
        )(xt, w1c, b1c, w2c, b2c)

    # Back to (B, num_output), dropping batch padding.
    return yt[:, :B].T


def _reference_forward(x, w1, b1, w2, b2, dtype=jnp.float32):
    xc, w1c, w2c = x.astype(dtype), w1.astype(dtype), w2.astype(dtype)
    h = jnp.dot(xc, w1c.T, preferred_element_type=jnp.float32) + b1
    h = jnp.maximum(h, 0.0)
    return jnp.dot(h.astype(dtype), w2c.T, preferred_element_type=jnp.float32) + b2


if __name__ == "__main__":
    # Shapes consistent with the module: num_vars=16, num_hidden=32, num_output=8.
    num_vars, num_hidden, num_output = 16, 32, 8

    key = jax.random.PRNGKey(0)
    kx, kxb, k1, kb1, k2, kb2 = jax.random.split(key, 6)

    # PyTorch-style uniform(-1/sqrt(fan_in), 1/sqrt(fan_in)) init, torch layout.
    bound1 = 1.0 / jnp.sqrt(jnp.float32(num_vars))
    bound2 = 1.0 / jnp.sqrt(jnp.float32(num_hidden))
    w1 = jax.random.uniform(k1, (num_hidden, num_vars), jnp.float32, -bound1, bound1)
    b1 = jax.random.uniform(kb1, (num_hidden,), jnp.float32, -bound1, bound1)
    w2 = jax.random.uniform(k2, (num_output, num_hidden), jnp.float32, -bound2, bound2)
    b2 = jax.random.uniform(kb2, (num_output,), jnp.float32, -bound2, bound2)

    # Case 1: tiny batch (single-block, gridless path).
    B_small = 8
    x_small = jax.random.normal(kx, (B_small, num_vars), dtype=jnp.float32)
    out_small = reg_model_forward(x_small, w1, b1, w2, b2)
    jax.block_until_ready(out_small)
    assert out_small.shape == (B_small, num_output)
    ref_bf16 = _reference_forward(x_small, w1, b1, w2, b2, dtype=jnp.bfloat16)
    ref_f32 = _reference_forward(x_small, w1, b1, w2, b2, dtype=jnp.float32)
    assert jnp.allclose(out_small, ref_bf16, atol=1e-3, rtol=1e-3)
    assert jnp.allclose(out_small, ref_f32, atol=3e-2, rtol=3e-2)

    # Case 2: batched path (grid over batch tiles, resident weights, "parallel").
    B_big = 1536  # 3 tiles of 512 lanes
    x_big = jax.random.normal(kxb, (B_big, num_vars), dtype=jnp.float32)
    out_big = reg_model_forward(x_big, w1, b1, w2, b2)
    jax.block_until_ready(out_big)
    assert out_big.shape == (B_big, num_output)
    ref_big_bf16 = _reference_forward(x_big, w1, b1, w2, b2, dtype=jnp.bfloat16)
    ref_big_f32 = _reference_forward(x_big, w1, b1, w2, b2, dtype=jnp.float32)
    assert jnp.allclose(out_big, ref_big_bf16, atol=1e-3, rtol=1e-3)
    assert jnp.allclose(out_big, ref_big_f32, atol=3e-2, rtol=3e-2)

    print("KERNEL_OK")
</pallas_src>

<mosaic_0001>
module attributes {stable_mosaic.version = 11 : i64} {
  func.func @_mlp_kernel(%arg0: memref<16x128xbf16, #tpu.memory_space<vmem>>, %arg1: memref<32x16xbf16, #tpu.memory_space<vmem>>, %arg2: memref<32x1xf32, #tpu.memory_space<vmem>>, %arg3: memref<8x32xbf16, #tpu.memory_space<vmem>>, %arg4: memref<8x1xf32, #tpu.memory_space<vmem>>, %arg5: memref<8x128xf32, #tpu.memory_space<vmem>>) attributes {dimension_semantics = [], scalar_prefetch = 0 : i64, scratch_operands = 0 : i64, tpu.core_type = #tpu.core_type<tc>} {
    %c0 = arith.constant 0 : index
    %c0_0 = arith.constant 0 : index
    %0 = vector.load %arg1[%c0, %c0_0] : memref<32x16xbf16, #tpu.memory_space<vmem>>, vector<32x16xbf16>
    %c0_1 = arith.constant 0 : index
    %c0_2 = arith.constant 0 : index
    %1 = vector.load %arg0[%c0_1, %c0_2] : memref<16x128xbf16, #tpu.memory_space<vmem>>, vector<16x128xbf16>
    %cst = arith.constant dense<0.000000e+00> : vector<32x128xf32>
    %2 = tpu.matmul %0, %1, %cst {dimension_numbers = #tpu.dot_dimension_numbers<[1], [0], [0], [1], [0, 0, 1, 1], [], []>} : vector<32x16xbf16>, vector<16x128xbf16>, vector<32x128xf32> -> vector<32x128xf32>
    %c0_3 = arith.constant 0 : index
    %c0_4 = arith.constant 0 : index
    %3 = vector.load %arg2[%c0_3, %c0_4] : memref<32x1xf32, #tpu.memory_space<vmem>>, vector<32x1xf32>
    %4 = vector.broadcast %3 : vector<32x1xf32> to vector<32x128xf32>
    %5 = arith.addf %2, %4 : vector<32x128xf32>
    %cst_5 = arith.constant 0.000000e+00 : f32
    %6 = vector.broadcast %cst_5 : f32 to vector<32x128xf32>
    %7 = arith.maximumf %5, %6 : vector<32x128xf32>
    %8 = arith.truncf %7 : vector<32x128xf32> to vector<32x128xbf16>
    %c0_6 = arith.constant 0 : index
    %c0_7 = arith.constant 0 : index
    %9 = vector.load %arg3[%c0_6, %c0_7] : memref<8x32xbf16, #tpu.memory_space<vmem>>, vector<8x32xbf16>
    %cst_8 = arith.constant dense<0.000000e+00> : vector<8x128xf32>
    %10 = tpu.matmul %9, %8, %cst_8 {dimension_numbers = #tpu.dot_dimension_numbers<[1], [0], [0], [1], [0, 0, 1, 1], [], []>} : vector<8x32xbf16>, vector<32x128xbf16>, vector<8x128xf32> -> vector<8x128xf32>
    %c0_9 = arith.constant 0 : index
    %c0_10 = arith.constant 0 : index
    %11 = vector.load %arg4[%c0_9, %c0_10] : memref<8x1xf32, #tpu.memory_space<vmem>>, vector<8x1xf32>
    %12 = vector.broadcast %11 : vector<8x1xf32> to vector<8x128xf32>
    %13 = arith.addf %10, %12 : vector<8x128xf32>
    %c0_11 = arith.constant 0 : index
    %c0_12 = arith.constant 0 : index
    %14 = vector.load %arg5[%c0_11, %c0_12] : memref<8x128xf32, #tpu.memory_space<vmem>>, vector<8x128xf32>
    tpu.vector_store %arg5[%c0_11, %c0_12], %13 {strides = array<i32>} : memref<8x128xf32, #tpu.memory_space<vmem>>, vector<8x128xf32>,
    return
  }
}

</mosaic_0001>

<llo_original>
// kernel: reg_model_forward.1
$region0: #{reg_model_forward.1}
  #allocation0 [shape = 'u32[]', space=smem, size = 0x4, offset = 0x4, fixed_abs, tag = 'smem constant byte address 0x4 - core index']
  #allocation1 [shape = 'u32[144,128]{1,0:T(1,128)}', space=vmem, size = 0x12000, scoped, tag = 'internal scratch']
  %s0 = inlined_call_operand.vmem [shape: bf16[16,128], index: 0, kind: input, shape index: {}]
  %s1 = inlined_call_operand.vmem [shape: bf16[32,16], index: 1, kind: input, shape index: {}]
  %s2 = inlined_call_operand.vmem [shape: f32[32,1], index: 2, kind: input, shape index: {}]
  %s3 = inlined_call_operand.vmem [shape: bf16[8,32], index: 3, kind: input, shape index: {}]
  %s4 = inlined_call_operand.vmem [shape: f32[8,1], index: 4, kind: input, shape index: {}]
  %s5 = inlined_call_operand.vmem [shape: f32[8,128], index: 5, kind: output, shape index: {}]
  %s6 = sld [smem:[#allocation0]]
  $region30: #{reg_model_forward.1} parent=0
    _
  %s8 = ssub.s32 1, %s6
  %s9 = scalar_select 0, %s8, %s6
  // Predicated region
  $region2: #{reg_model_forward.1} parent=0 // pred_check
    _
  $region3: #{reg_model_forward.1} parent=0 // pred_check_branch
    %11 = sbr.rel (0) target = $region5
  $region4: #{reg_model_forward.1} parent=0 // pred_region
    _
  $region5: #{reg_model_forward.1} parent=0 // pred_fallthru
    _
  // Predicated region
  $region6: #{reg_model_forward.1} parent=0 // pred_check
    _
  $region7: #{reg_model_forward.1} parent=0 // pred_check_branch
    %13 = sbr.rel (0) target = $region9
  $region8: #{reg_model_forward.1} parent=0 // pred_region
    _
  $region9: #{reg_model_forward.1} parent=0 // pred_fallthru
    _
  // Predicated region
  $region10: #{reg_model_forward.1} parent=0 // pred_check
    _
  $region11: #{reg_model_forward.1} parent=0 // pred_check_branch
    %15 = sbr.rel (0) target = $region13
  $region12: #{reg_model_forward.1} parent=0 // pred_region
    _
  $region13: #{reg_model_forward.1} parent=0 // pred_fallthru
    _
  // Predicated region
  $region14: #{reg_model_forward.1} parent=0 // pred_check
    _
  $region15: #{reg_model_forward.1} parent=0 // pred_check_branch
    %17 = sbr.rel (0) target = $region17
  $region16: #{reg_model_forward.1} parent=0 // pred_region
    _
  $region17: #{reg_model_forward.1} parent=0 // pred_fallthru
    _
  // Predicated region
  $region18: #{reg_model_forward.1} parent=0 // pred_check
    _
  $region19: #{reg_model_forward.1} parent=0 // pred_check_branch
    %19 = sbr.rel (0) target = $region21
  $region20: #{reg_model_forward.1} parent=0 // pred_region
    _
  $region21: #{reg_model_forward.1} parent=0 // pred_fallthru
    _
  %v21 = vld [vmem:[%s1] sm:$0xf]
  %v22 = vld [vmem:[%s1 + $0x4] sm:$0xf]
  %v23 = vld [vmem:[%s1 + $0x8] sm:$0xf]
  %v24 = vld [vmem:[%s1 + $0xc] sm:$0xf]
  %v25 = vld [vmem:[%s0] sm:$0xf]
  %v26 = vld [vmem:[%s0 + $0x4] sm:$0xf]
  %v27 = vld [vmem:[%s2] sm:$0xff]
  %v28 = vld [vmem:[%s2 + $0x8] sm:$0xff]
  %v29 = vld [vmem:[%s2 + $0x10] sm:$0xff]
  %v30 = vld [vmem:[%s2 + $0x18] sm:$0xff]
  %32 = vset.pattern.permute.xlu0 0
  %33 = vperm.xlu0 %32, %v27
  %v34 = vpop.permute.xlu0 %33
  %37 = vset.pattern.permute.xlu0 0
  %38 = vperm.xlu0 %37, %v28
  %v39 = vpop.permute.xlu0 %38
  %42 = vset.pattern.permute.xlu0 0
  %43 = vperm.xlu0 %42, %v29
  %v44 = vpop.permute.xlu0 %43
  %47 = vset.pattern.permute.xlu0 0
  %48 = vperm.xlu0 %47, %v30
  %v49 = vpop.permute.xlu0 %48
  %v55 = vunpack.c.l.b16 %v21
  %v56 = vunpack.c.l.b16 %v22
  %v57 = vunpack.c.l.b16 %v23
  %v58 = vunpack.c.l.b16 %v24
  %v59 = vpack.c.b16 %v56, %v55
  %v60 = vpack.c.b16 %v58, %v57
  %v63 = vunpack.c.l.b16 %v25
  %v64 = vunpack.c.l.b16 %v26
  %v65 = vpack.c.b16 %v64, %v63
  %vm67 = vcmask 130048
  %v69 = vsel %vm67, %v59, 0
  %v72 = vsel %vm67, %v60, 0
  %74 = vmatprep.subr.bf16.mxu0 0
  %75 = vmatpush1.bf16.msra.mxu0 0
  %76 = vmatprep.subr.bf16.mxu0 0
  %77 = vmatpush1.bf16.msra.mxu0 0
  %78 = vmatprep.subr.bf16.mxu0 0
  %79 = vmatpush1.bf16.msra.mxu0 0
  %80 = vmatprep.subr.bf16.mxu0 0
  %81 = vmatpush1.bf16.msra.mxu0 0
  %82 = vmatprep.subr.bf16.mxu0 0
  %83 = vmatpush1.bf16.msra.mxu0 0
  %84 = vmatprep.subr.bf16.mxu0 0
  %85 = vmatpush1.bf16.msra.mxu0 0
  %86 = vmatprep.subr.bf16.mxu0 0
  %87 = vmatpush1.bf16.msra.mxu0 0
  %88 = vmatprep.subr.bf16.mxu0 0
  %89 = vmatpush1.bf16.msra.mxu0 %v65
  %90 = vmatprep.subr.bf16.mxu0 0
  %91 = vmatpush2.bf16.msra.mxu0 0
  %92 = vmatprep.subr.bf16.mxu0 0
  %93 = vmatpush2.bf16.msra.mxu0 0
  %94 = vmatprep.subr.bf16.mxu0 0
  %95 = vmatpush2.bf16.msra.mxu0 0
  %96 = vmatprep.subr.bf16.mxu0 0
  %97 = vmatpush2.bf16.msra.mxu0 0
  %98 = vmatprep.subr.bf16.mxu0 0
  %99 = vmatpush2.bf16.msra.mxu0 0
  %100 = vmatprep.subr.bf16.mxu0 0
  %101 = vmatpush2.bf16.msra.mxu0 0
  %102 = vmatprep.subr.bf16.mxu0 0
  %103 = vmatpush2.bf16.msra.mxu0 0
  %104 = vmatprep.subr.bf16.mxu0 0
  %105 = vmatpush2.bf16.msra.mxu0 0
  %106 = vmatprep.mubr.bf16.mxu0 0
  %107 = vmatmul.mubr.bf16.gmra.mxu0 %v69
  %v108 = vpop.f32.mrf.mxu0
  %v109 = vadd.f32 %v34, %v108
  %v110 = vpop.f32.mrf.mxu0
  %v111 = vpop.f32.mrf.mxu0
  %v112 = vadd.f32 %v39, %v111
  %v113 = vpop.f32.mrf.mxu0
  %114 = vmatprep.mubr.bf16.mxu0 0
  %115 = vmatmul.mubr.bf16.gmra.mxu0 %v72
  %v116 = vpop.f32.mrf.mxu0
  %v117 = vadd.f32 %v44, %v116
  %v118 = vpop.f32.mrf.mxu0
  %v119 = vpop.f32.mrf.mxu0
  %v120 = vadd.f32 %v49, %v119
  %v121 = vpop.f32.mrf.mxu0
  %122 = vdwg.mxu0
  %v123 = vmax.f32 %v109, 0.0
  %v124 = vmax.f32 %v112, 0.0
  %v125 = vmax.f32 %v117, 0.0
  %v126 = vmax.f32 %v120, 0.0
  %v127 = vpack.c.bf16 %v124, %v123
  %v128 = vpack.c.bf16 %v126, %v125
  %v129 = vld [vmem:[%s3] sm:$0xf]
  %v130 = vld [vmem:[%s4] sm:$0xff]
  %132 = vset.pattern.permute.xlu0 0
  %133 = vperm.xlu0 %132, %v130
  %v134 = vpop.permute.xlu0 %133
  %vm136 = vcmask 261120
  %v138 = vsel %vm136, %v129, 0
  %140 = vmatprep.subr.bf16.mxu0 0
  %141 = vmatpush1.bf16.msra.mxu0 0
  %142 = vmatprep.subr.bf16.mxu0 0
  %143 = vmatpush1.bf16.msra.mxu0 0
  %144 = vmatprep.subr.bf16.mxu0 0
  %145 = vmatpush1.bf16.msra.mxu0 0
  %146 = vmatprep.subr.bf16.mxu0 0
  %147 = vmatpush1.bf16.msra.mxu0 0
  %148 = vmatprep.subr.bf16.mxu0 0
  %149 = vmatpush1.bf16.msra.mxu0 0
  %150 = vmatprep.subr.bf16.mxu0 0
  %151 = vmatpush1.bf16.msra.mxu0 0
  %152 = vmatprep.subr.bf16.mxu0 0
  %153 = vmatpush1.bf16.msra.mxu0 %v128
  %154 = vmatprep.subr.bf16.mxu0 0
  %155 = vmatpush1.bf16.msra.mxu0 %v127
  %156 = vmatprep.subr.bf16.mxu0 0
  %157 = vmatpush2.bf16.msra.mxu0 0
  %158 = vmatprep.subr.bf16.mxu0 0
  %159 = vmatpush2.bf16.msra.mxu0 0
  %160 = vmatprep.subr.bf16.mxu0 0
  %161 = vmatpush2.bf16.msra.mxu0 0
  %162 = vmatprep.subr.bf16.mxu0 0
  %163 = vmatpush2.bf16.msra.mxu0 0
  %164 = vmatprep.subr.bf16.mxu0 0
  %165 = vmatpush2.bf16.msra.mxu0 0
  %166 = vmatprep.subr.bf16.mxu0 0
  %167 = vmatpush2.bf16.msra.mxu0 0
  %168 = vmatprep.subr.bf16.mxu0 0
  %169 = vmatpush2.bf16.msra.mxu0 0
  %170 = vmatprep.subr.bf16.mxu0 0
  %171 = vmatpush2.bf16.msra.mxu0 0
  %172 = vmatprep.mubr.bf16.mxu0 0
  %173 = vmatmul.mubr.bf16.gmra.mxu0 %v138
  %v174 = vpop.f32.mrf.mxu0
  %v175 = vadd.f32 %v134, %v174
  %v176 = vpop.f32.mrf.mxu0
  %v177 = vpop.f32.mrf.mxu0
  %v178 = vpop.f32.mrf.mxu0
  %179 = vdwg.mxu0
  %180 = vst [vmem:[%s5] sm:$0xff] %v175
  // Predicated region
  $region22: #{reg_model_forward.1} parent=0 // pred_check
    _
  $region23: #{reg_model_forward.1} parent=0 // pred_check_branch
    %182 = sbr.rel (0) target = $region25
  $region24: #{reg_model_forward.1} parent=0 // pred_region
    _
  $region25: #{reg_model_forward.1} parent=0 // pred_fallthru
    _
  // Predicated region
  $region26: #{reg_model_forward.1} parent=0 // pred_check
    _
  $region27: #{reg_model_forward.1} parent=0 // pred_check_branch
    %184 = sbr.rel (0) target = $region29
  $region28: #{reg_model_forward.1} parent=0 // pred_region
    _
  $region29: #{reg_model_forward.1} parent=0 // pred_fallthru
    _

</llo_original>
